<compile_context>
chip_gen: v5e
topology: v5e:2x2
jax: 0.10.0
libtpu: 0.0.40
codegen_flags: <defaults>
</compile_context>

<pallas_src>
import functools

import jax
import jax.numpy as jnp
from jax.experimental import pallas as pl
from jax.experimental.pallas import tpu as pltpu

_SUB = 8      # sublanes per (8, 128) f32 tile
_LANE = 128   # lanes per tile


def _cdiv(a, b):
    return -(-a // b)


def _round_up(a, b):
    return _cdiv(a, b) * b


def _min_sublane_multiple(dtype):
    # Native (sublane, 128) tile: f32 -> 8, bf16 -> 16, int8/fp8 -> 32.
    return max(_SUB, 32 // max(1, jnp.dtype(dtype).itemsize))


def _tensorcores_per_chip():
    # v5e/v6e have 1 TensorCore per chip; v7x has 2.
    try:
        kind = jax.devices()[0].device_kind.lower()
    except Exception:
        return 1
    return 2 if ("v7" in kind or "tpu7" in kind) else 1


def _dice_ce_kernel(x_ref, t_ref, out_ref, acc_ref, *, squared_pred, block_rows,
                    blocks_per_core, full_rows, rem_lanes):
    """Accumulates [sum(p*t), sum(p), sum(t), sum(bce_unnegated)] into (4,8,128)."""
    c = pl.program_id(0)   # core axis ("parallel")
    i = pl.program_id(1)   # reduction axis ("arbitrary")

    @pl.when(i == 0)
    def _():
        acc_ref[...] = jnp.zeros_like(acc_ref)

    x = x_ref[...].astype(jnp.float32)
    t = jnp.clip(t_ref[...].astype(jnp.float32), 0.0, 1.0)   # torch.clamp(target, 0, 1)

    p = jax.nn.sigmoid(x)                                     # torch.sigmoid(input)
    if squared_pred:
        p = p * p                                             # input * input

    # BCELoss elementwise term on the (squared) probabilities with PyTorch's
    # log clamp at -100.  Accumulated UN-negated (saves VALU ops per vreg) and
    # written as log_1mp + t*(log_p - log_1mp)  ==  t*log_p + (1-t)*log_1mp.
    log_p = jnp.maximum(jnp.log(p), -100.0)
    log_1mp = jnp.maximum(jnp.log(1.0 - p), -100.0)
    nbce = log_1mp + t * (log_p - log_1mp)
    pt = p * t

    def psum(v):
        # (block_rows, 128) -> (8, 128) partial sums: reduce only the leading
        # (vreg) axis -> pure VPU adds, no XLU work in the hot loop.
        return jnp.sum(v.reshape(block_rows // _SUB, _SUB, _LANE), axis=0)

    # Logical position of this grid step (independent of the clamped DMA index).
    base_row = (c * blocks_per_core + i) * block_rows
    block_is_clean = base_row + block_rows <= full_rows   # every element valid

    @pl.when(block_is_clean)
    def _():
        acc_ref[0] += psum(pt)     # intersection
        acc_ref[1] += psum(p)      # sum(input)
        acc_ref[2] += psum(t)      # sum(target)
        acc_ref[3] += psum(nbce)   # sum of un-negated BCE terms

    @pl.when(jnp.logical_not(block_is_clean))
    def _():
        # Boundary / overhanging block: mask by logical element index so OOB
        # garbage (and the <128-lane tail pad) contributes exactly zero.
        row = base_row + jax.lax.broadcasted_iota(jnp.int32, (block_rows, _LANE), 0)
        if rem_lanes:
            lane = jax.lax.broadcasted_iota(jnp.int32, (block_rows, _LANE), 1)
            m = (row < full_rows) | ((row == full_rows) & (lane < rem_lanes))
        else:
            m = row < full_rows
        z = jnp.zeros((), jnp.float32)
        acc_ref[0] += psum(jnp.where(m, pt, z))
        acc_ref[1] += psum(jnp.where(m, p, z))
        acc_ref[2] += psum(jnp.where(m, t, z))
        acc_ref[3] += psum(jnp.where(m, nbce, z))

    @pl.when(i == pl.num_programs(1) - 1)
    def _():
        out_ref[0] = acc_ref[...]


def dice_ce_loss(x, target, *, smooth=1e-5, squared_pred=True, reduction="mean",
                 max_block_rows=8192):
    """Pallas TPU implementation of DiceCELoss.forward."""
    if reduction not in ("mean", "sum"):
        # TODO(synk): reduction='none' (per-element loss tensor) not implemented.
        raise NotImplementedError("reduction must be 'mean' or 'sum'")

    n = x.size
    if not jnp.issubdtype(x.dtype, jnp.floating):
        x = x.astype(jnp.float32)
    if not jnp.issubdtype(target.dtype, jnp.floating):
        target = target.astype(jnp.float32)

    xf = jnp.ravel(x)          # metadata-only for contiguous inputs; dtype passes through
    tf = jnp.ravel(target)

    rows = _cdiv(n, _LANE)
    lane_padded_n = rows * _LANE
    if lane_padded_n != n:
        # TODO(synk): when numel % 128 != 0 a minimal pad to the next 128-lane
        # boundary is unavoidable with the lane-dense 2D layout; this is the
        # only copy (block/core misalignment is handled in-kernel by masking).
        xf = jnp.pad(xf, (0, lane_padded_n - n))
        tf = jnp.pad(tf, (0, lane_padded_n - n))
    x2 = xf.reshape(rows, _LANE)
    t2 = tf.reshape(rows, _LANE)

    sub_mult = max(_min_sublane_multiple(x2.dtype), _min_sublane_multiple(t2.dtype))
    block_rows = min(max_block_rows, _round_up(rows, sub_mult))
    block_rows = max(sub_mult, _round_up(block_rows, sub_mult))   # dtype-safe min tile
    num_blocks = _cdiv(rows, block_rows)

    # Cross-TC split only where there are 2 TensorCores (v7x); pure loop otherwise.
    n_cores = 2 if (_tensorcores_per_chip() == 2 and num_blocks >= 2) else 1
    blocks_per_core = _cdiv(num_blocks, n_cores)

    kernel = functools.partial(
        _dice_ce_kernel,
        squared_pred=bool(squared_pred),
        block_rows=block_rows,
        blocks_per_core=blocks_per_core,
        full_rows=n // _LANE,
        rem_lanes=n % _LANE,
    )

    # The grid may overhang the array (ragged last block; on 2-TC parts up to
    # one fully out-of-range step).  Clamp the block index so the DMA always
    # targets a legal window; the kernel masks by logical indices, so clamped
    # (duplicated) steps contribute exactly zero.
    last_block = num_blocks - 1

    def in_map(c, i):
        return (jnp.minimum(c * blocks_per_core + i, last_block), 0)

    in_blk = pl.BlockSpec((block_rows, _LANE), in_map)

    in_bytes_per_step = block_rows * _LANE * (x2.dtype.itemsize + t2.dtype.itemsize)
    # Double-buffered inputs + headroom; covers v5e's 16 MiB default scoped VMEM.
    vmem_limit = int(max(32 * 1024 * 1024, 2 * in_bytes_per_step + (4 << 20)))

    partials = pl.pallas_call(
        kernel,
        out_shape=jax.ShapeDtypeStruct((n_cores, 4, _SUB, _LANE), jnp.float32),
        grid_spec=pltpu.PrefetchScalarGridSpec(
            num_scalar_prefetch=0,
            grid=(n_cores, blocks_per_core),
            in_specs=[in_blk, in_blk],
            out_specs=pl.BlockSpec((1, 4, _SUB, _LANE), lambda c, i: (c, 0, 0, 0)),
            scratch_shapes=[pltpu.VMEM((4, _SUB, _LANE), jnp.float32)],
        ),
        compiler_params=pltpu.CompilerParams(
            dimension_semantics=("parallel", "arbitrary"),
            vmem_limit_bytes=vmem_limit,
        ),
    )(x2, t2)

    # Tiny epilogue: combine per-core (4, 8, 128) partials into 4 scalars.
    sums = jnp.sum(partials, axis=(0, 2, 3))
    inter, sum_p, sum_t, sum_nbce = sums[0], sums[1], sums[2], sums[3]
    dice_coeff = (2.0 * inter + smooth) / (sum_p + sum_t + smooth)
    bce = -sum_nbce                                     # single negation here
    ce_loss = bce / n if reduction == "mean" else bce
    return 1.0 - dice_coeff + ce_loss   # (mean/sum of a scalar == scalar)


def _reference(x, target, smooth=1e-5):
    # Pure-JAX mirror of the PyTorch module (BCE is applied to the *squared*
    # sigmoid, exactly as the reference forward() does).
    p = jax.nn.sigmoid(x.astype(jnp.float32))
    p = p * p
    t = jnp.clip(target.astype(jnp.float32), 0.0, 1.0)
    inter = jnp.sum(p * t)
    dice = (2.0 * inter + smooth) / (jnp.sum(p) + jnp.sum(t) + smooth)
    bce = -(t * jnp.maximum(jnp.log(p), -100.0)
            + (1.0 - t) * jnp.maximum(jnp.log(1.0 - p), -100.0))
    return 1.0 - dice + jnp.mean(bce)


if __name__ == "__main__":
    key = jax.random.PRNGKey(0)
    k1, k2, k3, k4 = jax.random.split(key, 4)

    # Case 1: canonical small NCHW shape (128-aligned -> zero-copy path).
    x1 = jax.random.normal(k1, (2, 4, 16, 16), dtype=jnp.float32)
    t1 = (jax.random.uniform(k2, (2, 4, 16, 16)) > 0.5).astype(jnp.float32)
    out1 = jax.block_until_ready(dice_ce_loss(x1, t1))
    ref1 = _reference(x1, t1)
    assert jnp.allclose(out1, ref1, rtol=1e-5, atol=1e-5), (out1, ref1)

    # Case 2: ragged shape (numel % 128 != 0) -> minimal 128-lane pad +
    # in-kernel element masking of the boundary block.
    x2 = jax.random.normal(k3, (3, 5, 17, 13), dtype=jnp.float32)
    t2 = (jax.random.uniform(k4, (3, 5, 17, 13)) > 0.5).astype(jnp.float32)
    out2 = jax.block_until_ready(dice_ce_loss(x2, t2))
    ref2 = _reference(x2, t2)
    assert jnp.allclose(out2, ref2, rtol=1e-5, atol=1e-5), (out2, ref2)

    # Case 3: same ragged input with tiny blocks -> multi-step accumulation on
    # the "arbitrary" axis plus the masked final block.
    out3 = jax.block_until_ready(dice_ce_loss(x2, t2, max_block_rows=16))
    assert jnp.allclose(out3, ref2, rtol=1e-5, atol=1e-5), (out3, ref2)

    # Case 4: bf16 logits/targets streamed through HBM (half the bytes),
    # exercising the (16, 128) minimum-tile rounding; math is f32 in VMEM.
    xb = x2.astype(jnp.bfloat16)
    tb = t2.astype(jnp.bfloat16)
    out4 = jax.block_until_ready(dice_ce_loss(xb, tb, max_block_rows=16))
    ref4 = _reference(xb, tb)
    assert jnp.allclose(out4, ref4, rtol=1e-4, atol=1e-4), (out4, ref4)

    print("KERNEL_OK")
</pallas_src>

<mosaic_0001>
module attributes {stable_mosaic.version = 11 : i64} {
  func.func @_dice_ce_kernel(%arg0: i32, %arg1: i32, %arg2: memref<16x128xf32, #tpu.memory_space<vmem>>, %arg3: memref<16x128xf32, #tpu.memory_space<vmem>>, %arg4: memref<1x4x8x128xf32, #tpu.memory_space<vmem>>, %arg5: memref<4x8x128xf32, #tpu.memory_space<vmem>>) attributes {dimension_semantics = [#tpu.dimension_semantics<parallel>, #tpu.dimension_semantics<arbitrary>], iteration_bounds = array<i64: 1, 1>, scalar_prefetch = 0 : i64, scratch_operands = 1 : i64, tpu.core_type = #tpu.core_type<tc>, window_params = [{transform_indices = @transform_0, window_bounds = array<i64: 16, 128>}, {transform_indices = @transform_1, window_bounds = array<i64: 16, 128>}, {transform_indices = @transform_2, window_bounds = array<i64: 1, 4, 8, 128>}]} {
    %c0_i32 = arith.constant 0 : i32
    %0 = arith.cmpi eq, %arg1, %c0_i32 : i32
    %1 = arith.extui %0 : i1 to i32
    %c0_i32_0 = arith.constant 0 : i32
    %2 = arith.cmpi ne, %1, %c0_i32_0 : i32
    scf.if %2 {
      %cst_15 = arith.constant 0.000000e+00 : f32
      %40 = vector.broadcast %cst_15 : f32 to vector<4x8x128xf32>
      %c0_16 = arith.constant 0 : index
      %c0_17 = arith.constant 0 : index
      %c0_18 = arith.constant 0 : index
      %41 = vector.load %arg5[%c0_16, %c0_17, %c0_18] : memref<4x8x128xf32, #tpu.memory_space<vmem>>, vector<4x8x128xf32>
      tpu.vector_store %arg5[%c0_16, %c0_17, %c0_18], %40 {strides = array<i32>} : memref<4x8x128xf32, #tpu.memory_space<vmem>>, vector<4x8x128xf32>,
    } else {
    }
    %c0 = arith.constant 0 : index
    %c0_1 = arith.constant 0 : index
    %3 = vector.load %arg2[%c0, %c0_1] : memref<16x128xf32, #tpu.memory_space<vmem>>, vector<16x128xf32>
    %c0_2 = arith.constant 0 : index
    %c0_3 = arith.constant 0 : index
    %4 = vector.load %arg3[%c0_2, %c0_3] : memref<16x128xf32, #tpu.memory_space<vmem>>, vector<16x128xf32>
    %cst = arith.constant 0.000000e+00 : f32
    %cst_4 = arith.constant 1.000000e+00 : f32
    %5 = vector.broadcast %cst : f32 to vector<16x128xf32>
    %6 = arith.maximumf %5, %4 : vector<16x128xf32>
    %7 = vector.broadcast %cst_4 : f32 to vector<16x128xf32>
    %8 = arith.minimumf %7, %6 : vector<16x128xf32>
    %9 = arith.negf %3 : vector<16x128xf32>
    %10 = math.exp %9 : vector<16x128xf32>
    %cst_5 = arith.constant 1.000000e+00 : f32
    %11 = vector.broadcast %cst_5 : f32 to vector<16x128xf32>
    %12 = arith.addf %11, %10 : vector<16x128xf32>
    %13 = arith.divf %11, %12 : vector<16x128xf32>
    %14 = arith.mulf %13, %13 : vector<16x128xf32>
    %15 = math.log %14 : vector<16x128xf32>
    %cst_6 = arith.constant -1.000000e+02 : f32
    %16 = vector.broadcast %cst_6 : f32 to vector<16x128xf32>
    %17 = arith.maximumf %15, %16 : vector<16x128xf32>
    %cst_7 = arith.constant 1.000000e+00 : f32
    %18 = vector.broadcast %cst_7 : f32 to vector<16x128xf32>
    %19 = arith.subf %18, %14 : vector<16x128xf32>
    %20 = math.log %19 : vector<16x128xf32>
    %cst_8 = arith.constant -1.000000e+02 : f32
    %21 = vector.broadcast %cst_8 : f32 to vector<16x128xf32>
    %22 = arith.maximumf %20, %21 : vector<16x128xf32>
    %23 = arith.subf %17, %22 : vector<16x128xf32>
    %24 = arith.mulf %8, %23 : vector<16x128xf32>
    %25 = arith.addf %22, %24 : vector<16x128xf32>
    %26 = arith.mulf %14, %8 : vector<16x128xf32>
    %c1_i32 = arith.constant 1 : i32
    %27 = arith.muli %arg0, %c1_i32 : i32
    %28 = arith.addi %27, %arg1 : i32
    %c16_i32 = arith.constant 16 : i32
    %29 = arith.muli %28, %c16_i32 : i32
    %c16_i32_9 = arith.constant 16 : i32
    %30 = arith.addi %29, %c16_i32_9 : i32
    %c16_i32_10 = arith.constant 16 : i32
    %31 = arith.cmpi sle, %30, %c16_i32_10 : i32
    %32 = arith.extui %31 : i1 to i32
    %c0_i32_11 = arith.constant 0 : i32
    %33 = arith.cmpi ne, %32, %c0_i32_11 : i32
    scf.if %33 {
      %c0_15 = arith.constant 0 : index
      %c0_16 = arith.constant 0 : index
      %c0_17 = arith.constant 0 : index
      %40 = vector.load %arg5[%c0_15, %c0_16, %c0_17] : memref<4x8x128xf32, #tpu.memory_space<vmem>>, vector<1x8x128xf32>
      %41 = vector.shape_cast %40 : vector<1x8x128xf32> to vector<8x128xf32>
      %42 = vector.shape_cast %26 : vector<16x128xf32> to vector<2x8x128xf32>
      %cst_18 = arith.constant dense<0.000000e+00> : vector<8x128xf32>
      %43 = vector.multi_reduction <add>, %42, %cst_18 [0] : vector<2x8x128xf32> to vector<8x128xf32>
      %44 = arith.addf %41, %43 : vector<8x128xf32>
      %c0_19 = arith.constant 0 : index
      %c0_20 = arith.constant 0 : index
      %c0_21 = arith.constant 0 : index
      %45 = vector.load %arg5[%c0_19, %c0_20, %c0_21] : memref<4x8x128xf32, #tpu.memory_space<vmem>>, vector<1x8x128xf32>
      %46 = vector.shape_cast %45 : vector<1x8x128xf32> to vector<8x128xf32>
      %47 = vector.shape_cast %44 : vector<8x128xf32> to vector<1x8x128xf32>
      tpu.vector_store %arg5[%c0_19, %c0_20, %c0_21], %47 {strides = array<i32>} : memref<4x8x128xf32, #tpu.memory_space<vmem>>, vector<1x8x128xf32>,
      %c1 = arith.constant 1 : index
      %c0_22 = arith.constant 0 : index
      %c0_23 = arith.constant 0 : index
      %48 = vector.load %arg5[%c1, %c0_22, %c0_23] : memref<4x8x128xf32, #tpu.memory_space<vmem>>, vector<1x8x128xf32>
      %49 = vector.shape_cast %48 : vector<1x8x128xf32> to vector<8x128xf32>
      %50 = vector.shape_cast %14 : vector<16x128xf32> to vector<2x8x128xf32>
      %cst_24 = arith.constant dense<0.000000e+00> : vector<8x128xf32>
      %51 = vector.multi_reduction <add>, %50, %cst_24 [0] : vector<2x8x128xf32> to vector<8x128xf32>
      %52 = arith.addf %49, %51 : vector<8x128xf32>
      %c1_25 = arith.constant 1 : index
      %c0_26 = arith.constant 0 : index
      %c0_27 = arith.constant 0 : index
      %53 = vector.load %arg5[%c1_25, %c0_26, %c0_27] : memref<4x8x128xf32, #tpu.memory_space<vmem>>, vector<1x8x128xf32>
      %54 = vector.shape_cast %53 : vector<1x8x128xf32> to vector<8x128xf32>
      %55 = vector.shape_cast %52 : vector<8x128xf32> to vector<1x8x128xf32>
      tpu.vector_store %arg5[%c1_25, %c0_26, %c0_27], %55 {strides = array<i32>} : memref<4x8x128xf32, #tpu.memory_space<vmem>>, vector<1x8x128xf32>,
      %c2 = arith.constant 2 : index
      %c0_28 = arith.constant 0 : index
      %c0_29 = arith.constant 0 : index
      %56 = vector.load %arg5[%c2, %c0_28, %c0_29] : memref<4x8x128xf32, #tpu.memory_space<vmem>>, vector<1x8x128xf32>
      %57 = vector.shape_cast %56 : vector<1x8x128xf32> to vector<8x128xf32>
      %58 = vector.shape_cast %8 : vector<16x128xf32> to vector<2x8x128xf32>
      %cst_30 = arith.constant dense<0.000000e+00> : vector<8x128xf32>
      %59 = vector.multi_reduction <add>, %58, %cst_30 [0] : vector<2x8x128xf32> to vector<8x128xf32>
      %60 = arith.addf %57, %59 : vector<8x128xf32>
      %c2_31 = arith.constant 2 : index
      %c0_32 = arith.constant 0 : index
      %c0_33 = arith.constant 0 : index
      %61 = vector.load %arg5[%c2_31, %c0_32, %c0_33] : memref<4x8x128xf32, #tpu.memory_space<vmem>>, vector<1x8x128xf32>
      %62 = vector.shape_cast %61 : vector<1x8x128xf32> to vector<8x128xf32>
      %63 = vector.shape_cast %60 : vector<8x128xf32> to vector<1x8x128xf32>
      tpu.vector_store %arg5[%c2_31, %c0_32, %c0_33], %63 {strides = array<i32>} : memref<4x8x128xf32, #tpu.memory_space<vmem>>, vector<1x8x128xf32>,
      %c3 = arith.constant 3 : index
      %c0_34 = arith.constant 0 : index
      %c0_35 = arith.constant 0 : index
      %64 = vector.load %arg5[%c3, %c0_34, %c0_35] : memref<4x8x128xf32, #tpu.memory_space<vmem>>, vector<1x8x128xf32>
      %65 = vector.shape_cast %64 : vector<1x8x128xf32> to vector<8x128xf32>
      %66 = vector.shape_cast %25 : vector<16x128xf32> to vector<2x8x128xf32>
      %cst_36 = arith.constant dense<0.000000e+00> : vector<8x128xf32>
      %67 = vector.multi_reduction <add>, %66, %cst_36 [0] : vector<2x8x128xf32> to vector<8x128xf32>
      %68 = arith.addf %65, %67 : vector<8x128xf32>
      %c3_37 = arith.constant 3 : index
      %c0_38 = arith.constant 0 : index
      %c0_39 = arith.constant 0 : index
      %69 = vector.load %arg5[%c3_37, %c0_38, %c0_39] : memref<4x8x128xf32, #tpu.memory_space<vmem>>, vector<1x8x128xf32>
      %70 = vector.shape_cast %69 : vector<1x8x128xf32> to vector<8x128xf32>
      %71 = vector.shape_cast %68 : vector<8x128xf32> to vector<1x8x128xf32>
      tpu.vector_store %arg5[%c3_37, %c0_38, %c0_39], %71 {strides = array<i32>} : memref<4x8x128xf32, #tpu.memory_space<vmem>>, vector<1x8x128xf32>,
    } else {
    }
    %true = arith.constant true
    %34 = arith.xori %31, %true : i1
    %35 = arith.extui %34 : i1 to i32
    %c0_i32_12 = arith.constant 0 : i32
    %36 = arith.cmpi ne, %35, %c0_i32_12 : i32
    scf.if %36 {
      %40 = tpu.iota {dimensions = array<i32: 0>} : vector<16x128xi32>
      %41 = vector.broadcast %29 : i32 to vector<16x128xi32>
      %42 = arith.addi %41, %40 : vector<16x128xi32>
      %c16_i32_15 = arith.constant 16 : i32
      %43 = vector.broadcast %c16_i32_15 : i32 to vector<16x128xi32>
      %44 = arith.cmpi slt, %42, %43 : vector<16x128xi32>
      %c0_16 = arith.constant 0 : index
      %c0_17 = arith.constant 0 : index
      %c0_18 = arith.constant 0 : index
      %45 = vector.load %arg5[%c0_16, %c0_17, %c0_18] : memref<4x8x128xf32, #tpu.memory_space<vmem>>, vector<1x8x128xf32>
      %46 = vector.shape_cast %45 : vector<1x8x128xf32> to vector<8x128xf32>
      %cst_19 = arith.constant 0.000000e+00 : f32
      %47 = vector.broadcast %cst_19 : f32 to vector<16x128xf32>
      %48 = arith.select %44, %26, %47 : vector<16x128xi1>, vector<16x128xf32>
      %49 = vector.shape_cast %48 : vector<16x128xf32> to vector<2x8x128xf32>
      %cst_20 = arith.constant dense<0.000000e+00> : vector<8x128xf32>
      %50 = vector.multi_reduction <add>, %49, %cst_20 [0] : vector<2x8x128xf32> to vector<8x128xf32>
      %51 = arith.addf %46, %50 : vector<8x128xf32>
      %c0_21 = arith.constant 0 : index
      %c0_22 = arith.constant 0 : index
      %c0_23 = arith.constant 0 : index
      %52 = vector.load %arg5[%c0_21, %c0_22, %c0_23] : memref<4x8x128xf32, #tpu.memory_space<vmem>>, vector<1x8x128xf32>
      %53 = vector.shape_cast %52 : vector<1x8x128xf32> to vector<8x128xf32>
      %54 = vector.shape_cast %51 : vector<8x128xf32> to vector<1x8x128xf32>
      tpu.vector_store %arg5[%c0_21, %c0_22, %c0_23], %54 {strides = array<i32>} : memref<4x8x128xf32, #tpu.memory_space<vmem>>, vector<1x8x128xf32>,
      %c1 = arith.constant 1 : index
      %c0_24 = arith.constant 0 : index
      %c0_25 = arith.constant 0 : index
      %55 = vector.load %arg5[%c1, %c0_24, %c0_25] : memref<4x8x128xf32, #tpu.memory_space<vmem>>, vector<1x8x128xf32>
      %56 = vector.shape_cast %55 : vector<1x8x128xf32> to vector<8x128xf32>
      %cst_26 = arith.constant 0.000000e+00 : f32
      %57 = vector.broadcast %cst_26 : f32 to vector<16x128xf32>
      %58 = arith.select %44, %14, %57 : vector<16x128xi1>, vector<16x128xf32>
      %59 = vector.shape_cast %58 : vector<16x128xf32> to vector<2x8x128xf32>
      %cst_27 = arith.constant dense<0.000000e+00> : vector<8x128xf32>
      %60 = vector.multi_reduction <add>, %59, %cst_27 [0] : vector<2x8x128xf32> to vector<8x128xf32>
      %61 = arith.addf %56, %60 : vector<8x128xf32>
      %c1_28 = arith.constant 1 : index
      %c0_29 = arith.constant 0 : index
      %c0_30 = arith.constant 0 : index
      %62 = vector.load %arg5[%c1_28, %c0_29, %c0_30] : memref<4x8x128xf32, #tpu.memory_space<vmem>>, vector<1x8x128xf32>
      %63 = vector.shape_cast %62 : vector<1x8x128xf32> to vector<8x128xf32>
      %64 = vector.shape_cast %61 : vector<8x128xf32> to vector<1x8x128xf32>
      tpu.vector_store %arg5[%c1_28, %c0_29, %c0_30], %64 {strides = array<i32>} : memref<4x8x128xf32, #tpu.memory_space<vmem>>, vector<1x8x128xf32>,
      %c2 = arith.constant 2 : index
      %c0_31 = arith.constant 0 : index
      %c0_32 = arith.constant 0 : index
      %65 = vector.load %arg5[%c2, %c0_31, %c0_32] : memref<4x8x128xf32, #tpu.memory_space<vmem>>, vector<1x8x128xf32>
      %66 = vector.shape_cast %65 : vector<1x8x128xf32> to vector<8x128xf32>
      %cst_33 = arith.constant 0.000000e+00 : f32
      %67 = vector.broadcast %cst_33 : f32 to vector<16x128xf32>
      %68 = arith.select %44, %8, %67 : vector<16x128xi1>, vector<16x128xf32>
      %69 = vector.shape_cast %68 : vector<16x128xf32> to vector<2x8x128xf32>
      %cst_34 = arith.constant dense<0.000000e+00> : vector<8x128xf32>
      %70 = vector.multi_reduction <add>, %69, %cst_34 [0] : vector<2x8x128xf32> to vector<8x128xf32>
      %71 = arith.addf %66, %70 : vector<8x128xf32>
      %c2_35 = arith.constant 2 : index
      %c0_36 = arith.constant 0 : index
      %c0_37 = arith.constant 0 : index
      %72 = vector.load %arg5[%c2_35, %c0_36, %c0_37] : memref<4x8x128xf32, #tpu.memory_space<vmem>>, vector<1x8x128xf32>
      %73 = vector.shape_cast %72 : vector<1x8x128xf32> to vector<8x128xf32>
      %74 = vector.shape_cast %71 : vector<8x128xf32> to vector<1x8x128xf32>
      tpu.vector_store %arg5[%c2_35, %c0_36, %c0_37], %74 {strides = array<i32>} : memref<4x8x128xf32, #tpu.memory_space<vmem>>, vector<1x8x128xf32>,
      %c3 = arith.constant 3 : index
      %c0_38 = arith.constant 0 : index
      %c0_39 = arith.constant 0 : index
      %75 = vector.load %arg5[%c3, %c0_38, %c0_39] : memref<4x8x128xf32, #tpu.memory_space<vmem>>, vector<1x8x128xf32>
      %76 = vector.shape_cast %75 : vector<1x8x128xf32> to vector<8x128xf32>
      %cst_40 = arith.constant 0.000000e+00 : f32
      %77 = vector.broadcast %cst_40 : f32 to vector<16x128xf32>
      %78 = arith.select %44, %25, %77 : vector<16x128xi1>, vector<16x128xf32>
      %79 = vector.shape_cast %78 : vector<16x128xf32> to vector<2x8x128xf32>
      %cst_41 = arith.constant dense<0.000000e+00> : vector<8x128xf32>
      %80 = vector.multi_reduction <add>, %79, %cst_41 [0] : vector<2x8x128xf32> to vector<8x128xf32>
      %81 = arith.addf %76, %80 : vector<8x128xf32>
      %c3_42 = arith.constant 3 : index
      %c0_43 = arith.constant 0 : index
      %c0_44 = arith.constant 0 : index
      %82 = vector.load %arg5[%c3_42, %c0_43, %c0_44] : memref<4x8x128xf32, #tpu.memory_space<vmem>>, vector<1x8x128xf32>
      %83 = vector.shape_cast %82 : vector<1x8x128xf32> to vector<8x128xf32>
      %84 = vector.shape_cast %81 : vector<8x128xf32> to vector<1x8x128xf32>
      tpu.vector_store %arg5[%c3_42, %c0_43, %c0_44], %84 {strides = array<i32>} : memref<4x8x128xf32, #tpu.memory_space<vmem>>, vector<1x8x128xf32>,
    } else {
    }
    %c0_i32_13 = arith.constant 0 : i32
    %37 = arith.cmpi eq, %arg1, %c0_i32_13 : i32
    %38 = arith.extui %37 : i1 to i32
    %c0_i32_14 = arith.constant 0 : i32
    %39 = arith.cmpi ne, %38, %c0_i32_14 : i32
    scf.if %39 {
      %c0_15 = arith.constant 0 : index
      %c0_16 = arith.constant 0 : index
      %c0_17 = arith.constant 0 : index
      %40 = vector.load %arg5[%c0_15, %c0_16, %c0_17] : memref<4x8x128xf32, #tpu.memory_space<vmem>>, vector<4x8x128xf32>
      %c0_18 = arith.constant 0 : index
      %c0_19 = arith.constant 0 : index
      %c0_20 = arith.constant 0 : index
      %c0_21 = arith.constant 0 : index
      %41 = vector.load %arg4[%c0_18, %c0_19, %c0_20, %c0_21] : memref<1x4x8x128xf32, #tpu.memory_space<vmem>>, vector<1x4x8x128xf32>
      %42 = vector.shape_cast %41 : vector<1x4x8x128xf32> to vector<4x8x128xf32>
      %43 = vector.shape_cast %40 : vector<4x8x128xf32> to vector<1x4x8x128xf32>
      tpu.vector_store %arg4[%c0_18, %c0_19, %c0_20, %c0_21], %43 {strides = array<i32>} : memref<1x4x8x128xf32, #tpu.memory_space<vmem>>, vector<1x4x8x128xf32>,
    } else {
    }
    return
  }
  func.func @transform_0(%arg0: i32, %arg1: i32) -> (i32, i32) {
    %c1_i32 = arith.constant 1 : i32
    %0 = arith.muli %arg0, %c1_i32 : i32
    %1 = arith.addi %0, %arg1 : i32
    %c0_i32 = arith.constant 0 : i32
    %2 = arith.minsi %1, %c0_i32 : i32
    %c0_i32_0 = arith.constant 0 : i32
    %c0_i32_1 = arith.constant 0 : i32
    return %2, %c0_i32_0 : i32, i32
  }
  func.func @transform_1(%arg0: i32, %arg1: i32) -> (i32, i32) {
    %c1_i32 = arith.constant 1 : i32
    %0 = arith.muli %arg0, %c1_i32 : i32
    %1 = arith.addi %0, %arg1 : i32
    %c0_i32 = arith.constant 0 : i32
    %2 = arith.minsi %1, %c0_i32 : i32
    %c0_i32_0 = arith.constant 0 : i32
    %c0_i32_1 = arith.constant 0 : i32
    return %2, %c0_i32_0 : i32, i32
  }
  func.func @transform_2(%arg0: i32, %arg1: i32) -> (i32, i32, i32, i32) {
    %c0_i32 = arith.constant 0 : i32
    %c0_i32_0 = arith.constant 0 : i32
    %c0_i32_1 = arith.constant 0 : i32
    %c0_i32_2 = arith.constant 0 : i32
    return %arg0, %c0_i32, %c0_i32_0, %c0_i32_1 : i32, i32, i32, i32
  }
}

</mosaic_0001>

<llo_original>
// kernel: tpu_custom_call.1
$region0: #{tpu_custom_call.1}
  #allocation0 [shape = 'u32[]', space=smem, size = 0x4, offset = 0x4, fixed_abs, tag = 'smem constant byte address 0x4 - core index']
  #allocation1 [shape = 'u32[72,128]{1,0:T(1,128)}', space=vmem, size = 0x9000, scoped, tag = 'internal scratch']
  #allocation2 [shape = 'f32[4,8,128]{2,1,0:T(8,128)}', space=vmem, size = 0x4000, scoped, tag = 'scratch operand']
  %s0 = inlined_call_operand.hbm [shape: f32[16,128], index: 0, kind: input, shape index: {}]
  %s1 = inlined_call_operand.hbm [shape: f32[16,128], index: 1, kind: input, shape index: {}]
  %s2 = inlined_call_operand.hbm [shape: f32[1,4,8,128], index: 2, kind: output, shape index: {}]
  %s3 = sld [smem:[#allocation0]]
  $region42: #{tpu_custom_call.1} parent=0
    _
  %s5 = ssub.s32 1, %s3
  %s6 = scalar_select 0, %s5, %s3
  $region1: #{tpu_custom_call.1} parent=0
    #allocation3 [shape = 'u8[8192]{0}', space=vmem, size = 0x2000, scoped, tag = 'input window, operand 0, single buffered']
    #allocation4 [shape = 's32[1]{0}', space=sflag, size = 0x4, scoped, tag = 'scoped memory for tpu_custom_call.1']
    #allocation5 [shape = 's32[1]{0}', space=sflag, size = 0x4, scoped, tag = 'scoped memory for tpu_custom_call.1']
    #allocation6 [shape = 'u8[8192]{0}', space=vmem, size = 0x2000, scoped, tag = 'input window, operand 1, single buffered']
    #allocation7 [shape = 's32[1]{0}', space=sflag, size = 0x4, scoped, tag = 'scoped memory for tpu_custom_call.1']
    #allocation8 [shape = 'u8[16384]{0}', space=vmem, size = 0x4000, scoped, tag = 'output window, operand 0, single buffered']
    %7 = vsyncpa [#allocation4], 0
    %8 = vsyncpa [#allocation7], 0
    %9 = vsyncpa [#allocation5], 0
    // Predicated region
    $region2: #{tpu_custom_call.1} parent=1 // pred_check
      _
    $region3: #{tpu_custom_call.1} parent=1 // pred_check_branch
      %11 = sbr.rel (0) target = $region5
    $region4: #{tpu_custom_call.1} parent=1 // pred_region
      %s12 = sadd.s32 0, 0
      %p13 = scmp.lt.s32.totalorder %s12, 0
      %s14 = scalar_select %p13, %s12, 0
      %s15 = smul.u32 2, %s14
      %17 = vsyncadd [#allocation4], 0
      %s18 = smul.addr %s15, 8
      %s19 = scalar_lea.hbm %s0, %s18
      %s20 = sshll.u32 %s19, 4
      %s21 = int_to_ptr.hbm [resolvable:$true] %s20
      %s22 = sshll.u32 [#allocation3], 4
      %s23 = int_to_ptr.vmem [resolvable:$true] %s22
      %28 = dma.hbm_to_vmem [thread:$0]  %s21, 256, %s23, [#allocation4], 128, 128, 8
    $region5: #{tpu_custom_call.1} parent=1 // pred_fallthru
      _
    // Predicated region
    $region6: #{tpu_custom_call.1} parent=1 // pred_check
      _
    $region7: #{tpu_custom_call.1} parent=1 // pred_check_branch
      %30 = sbr.rel (0) target = $region9
    $region8: #{tpu_custom_call.1} parent=1 // pred_region
      %s31 = sadd.s32 0, 0
      %p32 = scmp.lt.s32.totalorder %s31, 0
      %s33 = scalar_select %p32, %s31, 0
      %s34 = smul.u32 2, %s33
      %36 = vsyncadd [#allocation7], 0
      %s37 = smul.addr %s34, 8
      %s38 = scalar_lea.hbm %s1, %s37
      %s39 = sshll.u32 %s38, 4
      %s40 = int_to_ptr.hbm [resolvable:$true] %s39
      %s41 = sshll.u32 [#allocation6], 4
      %s42 = int_to_ptr.vmem [resolvable:$true] %s41
      %47 = dma.hbm_to_vmem [thread:$0]  %s40, 256, %s42, [#allocation7], 128, 128, 8
    $region9: #{tpu_custom_call.1} parent=1 // pred_fallthru
      _
    // Predicated region
    $region10: #{tpu_custom_call.1} parent=1 // pred_check
      _
    $region11: #{tpu_custom_call.1} parent=1 // pred_check_branch
      %49 = sbr.rel (0) target = $region13
    $region12: #{tpu_custom_call.1} parent=1 // pred_region
      %51 = dma.done [#allocation4], 256
    $region13: #{tpu_custom_call.1} parent=1 // pred_fallthru
      _
    // Predicated region
    $region14: #{tpu_custom_call.1} parent=1 // pred_check
      _
    $region15: #{tpu_custom_call.1} parent=1 // pred_check_branch
      %53 = sbr.rel (0) target = $region17
    $region16: #{tpu_custom_call.1} parent=1 // pred_region
      %55 = dma.done [#allocation7], 256
    $region17: #{tpu_custom_call.1} parent=1 // pred_fallthru
      _
    %s56 = sadd.s32 0, 0
    %p57 = scmp.lt.s32.totalorder %s56, 0
    %s58 = scalar_select %p57, %s56, 0
    %s59 = smul.u32 2, %s58
    %s60 = sadd.s32 0, 0
    %p61 = scmp.lt.s32.totalorder %s60, 0
    %s62 = scalar_select %p61, %s60, 0
    %s63 = smul.u32 2, %s62
    %p64 = scmp.eq.s32.totalorder 0, 0
    // Predicated region
    $region18: #{tpu_custom_call.1} parent=1 // pred_check
      %p65 = pneg %p64
    $region19: #{tpu_custom_call.1} parent=1 // pred_check_branch
      %67 = sbr.rel (%p65) target = $region21
    $region20: #{tpu_custom_call.1} parent=1 // pred_region
      %68 = vst [vmem:[#allocation2] sm:$0xff] 0.0
      %69 = vst [vmem:[#allocation2 + $0x8] sm:$0xff] 0.0
      %70 = vst [vmem:[#allocation2 + $0x10] sm:$0xff] 0.0
      %71 = vst [vmem:[#allocation2 + $0x18] sm:$0xff] 0.0
    $region21: #{tpu_custom_call.1} parent=1 // pred_fallthru
      _
    %v72 = vld [vmem:[#allocation3] sm:$0xff]
    %v73 = vld [vmem:[#allocation3 + $0x8] sm:$0xff]
    %v74 = vld [vmem:[#allocation6] sm:$0xff]
    %v75 = vld [vmem:[#allocation6 + $0x8] sm:$0xff]
    %v76 = vmax.f32 %v74, 0.0
    %v77 = vmax.f32 %v75, 0.0
    %v78 = vmin.f32 %v76, 1.0
    %v79 = vmin.f32 %v77, 1.0
    %v80 = vxor.u32 %v72, 2147483648
    %v81 = vxor.u32 %v73, 2147483648
    %v82 = vmul.f32 %v80, 1.442695
    %v83 = vpow.pop %v82
    %v84 = vmul.f32 %v81, 1.442695
    %v85 = vpow.pop %v84
    %v86 = vadd.f32 %v83, 1.0
    %v87 = vadd.f32 %v85, 1.0
    %v88 = vrcp.pop %v86
    %v89 = vmul.f32 %v86, %v88
    %v90 = vsub.f32 1.0, %v89
    %v91 = vmul.f32 %v88, %v90
    %v92 = vadd.f32 %v88, %v91
    %vm93 = vweird.f32 %v86
    %vm94 = vweird.f32 %v88
    %vm95 = vmor %vm93, %vm94
    %v96 = vsel %vm95, %v88, %v92
    %v97 = vand.u32 2147483647, %v86
    %vm98 = vcmp.eq.f32.partialorder %v97, 8.507059e+37
    %v99 = vand.u32 %v86, 2147483648
    %v100 = vor.u32 1.1754944e-38, %v99
    %v101 = vsel %vm98, %v100, %v96
    %v102 = vmul.f32 1.0, %v101
    %v103 = vrcp.pop %v87
    %v104 = vmul.f32 %v87, %v103
    %v105 = vsub.f32 1.0, %v104
    %v106 = vmul.f32 %v103, %v105
    %v107 = vadd.f32 %v103, %v106
    %vm108 = vweird.f32 %v87
    %vm109 = vweird.f32 %v103
    %vm110 = vmor %vm108, %vm109
    %v111 = vsel %vm110, %v103, %v107
    %v112 = vand.u32 2147483647, %v87
    %vm113 = vcmp.eq.f32.partialorder %v112, 8.507059e+37
    %v114 = vand.u32 %v87, 2147483648
    %v115 = vor.u32 1.1754944e-38, %v114
    %v116 = vsel %vm113, %v115, %v111
    %v117 = vmul.f32 1.0, %v116
    %v118 = vmul.f32 %v102, %v102
    %v119 = vmul.f32 %v117, %v117
    %v120 = vlog2.pop %v118
    %v121 = vmul.f32 %v120, 0.6931472
    %v122 = vlog2.pop %v119
    %v123 = vmul.f32 %v122, 0.6931472
    %v124 = vmax.f32 %v121, -100.0
    %v125 = vmax.f32 %v123, -100.0
    %v126 = vsub.f32 1.0, %v118
    %v127 = vsub.f32 1.0, %v119
    %v128 = vlog2.pop %v126
    %v129 = vmul.f32 %v128, 0.6931472
    %v130 = vlog2.pop %v127
    %v131 = vmul.f32 %v130, 0.6931472
    %v132 = vmax.f32 %v129, -100.0
    %v133 = vmax.f32 %v131, -100.0
    %v134 = vsub.f32 %v124, %v132
    %v135 = vsub.f32 %v125, %v133
    %v136 = vmul.f32 %v78, %v134
    %v137 = vmul.f32 %v79, %v135
    %v138 = vadd.f32 %v132, %v136
    %v139 = vadd.f32 %v133, %v137
    %v140 = vmul.f32 %v118, %v78
    %v141 = vmul.f32 %v119, %v79
    %s142 = sadd.s32 0, 0
    %s143 = smul.u32 %s142, 16
    %s144 = sadd.s32 %s143, 16
    %p145 = scmp.le.s32.totalorder %s144, 16
    // Predicated region
    $region22: #{tpu_custom_call.1} parent=1 // pred_check
      %p146 = pneg %p145
    $region23: #{tpu_custom_call.1} parent=1 // pred_check_branch
      %148 = sbr.rel (%p146) target = $region25
    $region24: #{tpu_custom_call.1} parent=1 // pred_region
      %v149 = vld [vmem:[#allocation2] sm:$0xff]
      %v150 = vadd.f32 %v140, %v141
      %v151 = vadd.f32 %v149, %v150
      %152 = vst [vmem:[#allocation2] sm:$0xff] %v151
      %s153 = scalar_lea.vmem [#allocation2], 8
      %v154 = vld [vmem:[%s153] sm:$0xff]
      %v155 = vadd.f32 %v118, %v119
      %v156 = vadd.f32 %v154, %v155
      %157 = vst [vmem:[%s153] sm:$0xff] %v156
      %s158 = scalar_lea.vmem [#allocation2], 16
      %v159 = vld [vmem:[%s158] sm:$0xff]
      %v160 = vadd.f32 %v78, %v79
      %v161 = vadd.f32 %v159, %v160
      %162 = vst [vmem:[%s158] sm:$0xff] %v161
      %s163 = scalar_lea.vmem [#allocation2], 24
      %v164 = vld [vmem:[%s163] sm:$0xff]
      %v165 = vadd.f32 %v138, %v139
      %v166 = vadd.f32 %v164, %v165
      %167 = vst [vmem:[%s163] sm:$0xff] %v166
    $region25: #{tpu_custom_call.1} parent=1 // pred_fallthru
      _
    %p168 = scmp.gt.s32.totalorder %s144, 16
    // Predicated region
    $region26: #{tpu_custom_call.1} parent=1 // pred_check
      %p169 = pneg %p168
    $region27: #{tpu_custom_call.1} parent=1 // pred_check_branch
      %171 = sbr.rel (%p169) target = $region29
    $region28: #{tpu_custom_call.1} parent=1 // pred_region
      %v172 = vlaneseq
      %v173 = vshrl.u32 %v172, 7
      %v174 = vadd.s32 %v173, 8
      %v175 = vstv %s143
      %v176 = vadd.s32 %v175, %v173
      %v177 = vadd.s32 %v175, %v174
      %vm178 = vcmp.lt.s32.totalorder %v176, 16
      %vm179 = vcmp.lt.s32.totalorder %v177, 16
      %v180 = vld [vmem:[#allocation2] sm:$0xff]
      %v181 = vsel %vm178, %v140, 0.0
      %v182 = vsel %vm179, %v141, 0.0
      %v183 = vadd.f32 %v181, %v182
      %v184 = vadd.f32 %v180, %v183
      %185 = vst [vmem:[#allocation2] sm:$0xff] %v184
      %s186 = scalar_lea.vmem [#allocation2], 8
      %v187 = vld [vmem:[%s186] sm:$0xff]
      %v188 = vsel %vm178, %v118, 0.0
      %v189 = vsel %vm179, %v119, 0.0
      %v190 = vadd.f32 %v188, %v189
      %v191 = vadd.f32 %v187, %v190
      %192 = vst [vmem:[%s186] sm:$0xff] %v191
      %s193 = scalar_lea.vmem [#allocation2], 16
      %v194 = vld [vmem:[%s193] sm:$0xff]
      %v195 = vsel %vm178, %v78, 0.0
      %v196 = vsel %vm179, %v79, 0.0
      %v197 = vadd.f32 %v195, %v196
      %v198 = vadd.f32 %v194, %v197
      %199 = vst [vmem:[%s193] sm:$0xff] %v198
      %s200 = scalar_lea.vmem [#allocation2], 24
      %v201 = vld [vmem:[%s200] sm:$0xff]
      %v202 = vsel %vm178, %v138, 0.0
      %v203 = vsel %vm179, %v139, 0.0
      %v204 = vadd.f32 %v202, %v203
      %v205 = vadd.f32 %v201, %v204
      %206 = vst [vmem:[%s200] sm:$0xff] %v205
    $region29: #{tpu_custom_call.1} parent=1 // pred_fallthru
      _
    // Predicated region
    $region30: #{tpu_custom_call.1} parent=1 // pred_check
      %p207 = pneg %p64
    $region31: #{tpu_custom_call.1} parent=1 // pred_check_branch
      %209 = sbr.rel (%p207) target = $region33
    $region32: #{tpu_custom_call.1} parent=1 // pred_region
      %v210 = vld [vmem:[#allocation2] sm:$0xff]
      %v211 = vld [vmem:[#allocation2 + $0x8] sm:$0xff]
      %v212 = vld [vmem:[#allocation2 + $0x10] sm:$0xff]
      %v213 = vld [vmem:[#allocation2 + $0x18] sm:$0xff]
      %214 = vst [vmem:[#allocation8] sm:$0xff] %v210
      %215 = vst [vmem:[#allocation8 + $0x8] sm:$0xff] %v211
      %216 = vst [vmem:[#allocation8 + $0x10] sm:$0xff] %v212
      %217 = vst [vmem:[#allocation8 + $0x18] sm:$0xff] %v213
    $region33: #{tpu_custom_call.1} parent=1 // pred_fallthru
      _
    // Predicated region
    $region34: #{tpu_custom_call.1} parent=1 // pred_check
      _
    $region35: #{tpu_custom_call.1} parent=1 // pred_check_branch
      %219 = sbr.rel (0) target = $region37
    $region36: #{tpu_custom_call.1} parent=1 // pred_region
      %221 = vsyncadd [#allocation5], 0
      %s222 = sshll.u32 [#allocation8], 4
      %s223 = int_to_ptr.vmem [resolvable:$true] %s222
      %s224 = sshll.u32 %s2, 4
      %s225 = int_to_ptr.hbm [resolvable:$true] %s224
      %230 = dma.vmem_to_hbm [thread:$0]  %s223, 512, %s225, [#allocation5], 128, 128, 8
    $region37: #{tpu_custom_call.1} parent=1 // pred_fallthru
      _
    // Predicated region
    $region38: #{tpu_custom_call.1} parent=1 // pred_check
      _
    $region39: #{tpu_custom_call.1} parent=1 // pred_check_branch
      %232 = sbr.rel (0) target = $region41
    $region40: #{tpu_custom_call.1} parent=1 // pred_region
      %234 = dma.done [#allocation5], 512
    $region41: #{tpu_custom_call.1} parent=1 // pred_fallthru
      _
    %235 = vsyncpa [#allocation4], 1
    %236 = vsyncpa [#allocation7], 1
    %237 = vsyncpa [#allocation5], 1

</llo_original>
